<compile_context>
chip_gen: v5e
topology: v5e:2x2
jax: 0.10.0
libtpu: 0.0.40
codegen_flags: <defaults>
</compile_context>

<pallas_src>
import math
import functools

import jax
import jax.numpy as jnp
from jax.experimental import pallas as pl
from jax.experimental.pallas import tpu as pltpu


_INV_SQRT2 = 1.0 / math.sqrt(2.0)


def _round_up(x, m):
    return ((x + m - 1) // m) * m


def _tokenizer_kernel(p_ref, w_ref, b_ref, pe_ref, o_ref):
    # p_ref : (TM, Kp)   patch rows (rows = collapsed batch*time)
    # w_ref : (Kp, Dp)   conv weight (padded), resident across grid steps
    # b_ref : (1,  Dp)   conv bias  (added BEFORE the GELU), resident
    # pe_ref: (TM, Dp)   positional-encoding rows (added AFTER the GELU)
    # o_ref : (TM, Dp)
    z = jnp.dot(p_ref[...], w_ref[...], preferred_element_type=jnp.float32)
    z = z + b_ref[...]
    # exact GELU (PyTorch nn.GELU() default, approximate='none')
    z = 0.5 * z * (1.0 + jax.lax.erf(z * _INV_SQRT2))
    o_ref[...] = (z + pe_ref[...]).astype(o_ref.dtype)


def sinusoid_pe(seq_len, dim, dtype=jnp.float32):
    """Standard sinusoidal positional encoding, shape (seq_len, dim). Odd-dim safe."""
    pos = jnp.arange(seq_len, dtype=jnp.float32)[:, None]             # (T, 1)
    div = jnp.exp(jnp.arange(0, dim, 2, dtype=jnp.float32)
                  * (-math.log(10000.0) / dim))                       # (ceil(D/2),)
    pe = jnp.zeros((seq_len, dim), dtype=jnp.float32)
    pe = pe.at[:, 0::2].set(jnp.sin(pos * div))
    pe = pe.at[:, 1::2].set(jnp.cos(pos * div)[:, : dim // 2])
    return pe.astype(dtype)


@functools.partial(jax.jit, static_argnames=("clip_size", "use_bf16", "row_tile"))
def tokenizer1d(x, weight, bias, clip_size, use_bf16=False, row_tile=512):
    """x: (B, Cin, L) f32.  weight: (D, Cin, clip).  bias: (D,).  -> (B, T, D)."""
    B, Cin, L = x.shape
    D = weight.shape[0]
    T = L // clip_size                               # num_clips
    K = Cin * clip_size
    R = B * T                                        # collapsed rows

    # padded / tiled sizes (lane-dense last dims, sublane-aligned row tile)
    Kp = _round_up(K, 128)
    Dp = _round_up(D, 128)
    R8 = _round_up(R, 8)
    TM = min(row_tile, R8)                           # row tile, multiple of 8
    Rp = _round_up(R, TM)

    # ---- glue: patch extraction (non-overlapping conv windows) ----
    # TODO(synk): this transpose still materializes one extra activation pass in
    # HBM; folding Cin as an in-kernel reduction axis would remove it.
    patches = x.reshape(B, Cin, T, clip_size)
    patches = jnp.transpose(patches, (0, 2, 1, 3)).reshape(R, K)
    patches = jnp.pad(patches, ((0, Rp - R), (0, Kp - K)))

    w_mat = jnp.pad(weight.reshape(D, K).T, ((0, Kp - K), (0, Dp - D)))   # (Kp, Dp)
    b_row = jnp.pad(bias.reshape(1, D), ((0, 0), (0, Dp - D)))            # (1, Dp)

    pe = jnp.pad(sinusoid_pe(T, D), ((0, 0), (0, Dp - D)))                # (T, Dp)
    pe_rows = jnp.broadcast_to(pe[None], (B, T, Dp)).reshape(R, Dp)
    pe_rows = jnp.pad(pe_rows, ((0, Rp - R), (0, 0)))                     # (Rp, Dp)

    if use_bf16:
        # bf16 matmul inputs (MXU-native); accumulation & epilogue stay f32.
        patches = patches.astype(jnp.bfloat16)
        w_mat = w_mat.astype(jnp.bfloat16)

    out = pl.pallas_call(
        _tokenizer_kernel,
        out_shape=jax.ShapeDtypeStruct((Rp, Dp), x.dtype),
        grid=(Rp // TM,),
        in_specs=[
            pl.BlockSpec((TM, Kp), lambda i: (i, 0)),    # patch rows (pipelined)
            pl.BlockSpec((Kp, Dp), lambda i: (0, 0)),    # weight (resident)
            pl.BlockSpec((1, Dp), lambda i: (0, 0)),     # bias   (resident)
            pl.BlockSpec((TM, Dp), lambda i: (i, 0)),    # PE rows (pipelined)
        ],
        out_specs=pl.BlockSpec((TM, Dp), lambda i: (i, 0)),
        compiler_params=pltpu.CompilerParams(
            dimension_semantics=("parallel",)),
    )(patches, w_mat, b_row, pe_rows)

    return out[:R, :D].reshape(B, T, D)


def _reference(x, weight, bias, clip_size):
    """Pure-JAX reference (same math as the PyTorch module)."""
    B, Cin, L = x.shape
    D = weight.shape[0]
    T = L // clip_size
    patches = x.reshape(B, Cin, T, clip_size).transpose(0, 2, 1, 3).reshape(
        B, T, Cin * clip_size)
    z = patches @ weight.reshape(D, -1).T + bias[None, None, :]
    z = 0.5 * z * (1.0 + jax.lax.erf(z / math.sqrt(2.0)))
    return z + sinusoid_pe(T, D)[None]


if __name__ == "__main__":
    # small, conv-consistent shapes
    B, Cin, L = 2, 4, 128          # input_dim=4, length=128
    clip_size = 8                  # kernel == stride
    D = 32                         # token_dim
    T = L // clip_size             # num_clips = 16

    key = jax.random.PRNGKey(0)
    kx, kw, kb = jax.random.split(key, 3)
    x = jax.random.normal(kx, (B, Cin, L), dtype=jnp.float32)
    # deterministic synthetic parameters (Conv1d: weight (D, Cin, clip), bias (D,))
    fan_in = Cin * clip_size
    bound = 1.0 / math.sqrt(fan_in)
    weight = jax.random.uniform(kw, (D, Cin, clip_size),
                                minval=-bound, maxval=bound, dtype=jnp.float32)
    bias = jax.random.uniform(kb, (D,), minval=-bound, maxval=bound,
                              dtype=jnp.float32)

    ref = _reference(x, weight, bias, clip_size)

    # exact-f32 path: parity with the PyTorch module
    out = jax.block_until_ready(tokenizer1d(x, weight, bias, clip_size))
    assert out.shape == (B, T, D), out.shape
    assert jnp.allclose(out, ref, atol=1e-5, rtol=1e-5), "f32 mismatch vs reference"

    # bf16-matmul fast path (halves matmul-input HBM traffic)
    out_bf16 = jax.block_until_ready(
        tokenizer1d(x, weight, bias, clip_size, use_bf16=True))
    assert jnp.allclose(out_bf16, ref, atol=1e-1, rtol=1e-1), "bf16 mismatch vs reference"

    print("KERNEL_OK")
</pallas_src>

<mosaic_0001>
module attributes {stable_mosaic.version = 11 : i64} {
  func.func @_tokenizer_kernel(%arg0: i32, %arg1: memref<32x128xf32, #tpu.memory_space<vmem>>, %arg2: memref<128x128xf32, #tpu.memory_space<vmem>>, %arg3: memref<1x128xf32, #tpu.memory_space<vmem>>, %arg4: memref<32x128xf32, #tpu.memory_space<vmem>>, %arg5: memref<32x128xf32, #tpu.memory_space<vmem>>) attributes {dimension_semantics = [#tpu.dimension_semantics<parallel>], iteration_bounds = array<i64: 1>, scalar_prefetch = 0 : i64, scratch_operands = 0 : i64, tpu.core_type = #tpu.core_type<tc>, window_params = [{transform_indices = @transform_0, window_bounds = array<i64: 32, 128>}, {pipeline_mode = #tpu.pipeline_mode<synchronous>, transform_indices = @transform_1, window_bounds = array<i64: 128, 128>}, {pipeline_mode = #tpu.pipeline_mode<synchronous>, transform_indices = @transform_2, window_bounds = array<i64: 1, 128>}, {transform_indices = @transform_3, window_bounds = array<i64: 32, 128>}, {transform_indices = @transform_4, window_bounds = array<i64: 32, 128>}]} {
    %c0 = arith.constant 0 : index
    %c0_0 = arith.constant 0 : index
    %0 = vector.load %arg1[%c0, %c0_0] : memref<32x128xf32, #tpu.memory_space<vmem>>, vector<32x128xf32>
    %c0_1 = arith.constant 0 : index
    %c0_2 = arith.constant 0 : index
    %1 = vector.load %arg2[%c0_1, %c0_2] : memref<128x128xf32, #tpu.memory_space<vmem>>, vector<128x128xf32>
    %cst = arith.constant dense<0.000000e+00> : vector<32x128xf32>
    %2 = tpu.matmul %0, %1, %cst {dimension_numbers = #tpu.dot_dimension_numbers<[1], [0], [0], [1], [0, 0, 1, 1], [], []>} : vector<32x128xf32>, vector<128x128xf32>, vector<32x128xf32> -> vector<32x128xf32>
    %c0_3 = arith.constant 0 : index
    %c0_4 = arith.constant 0 : index
    %3 = vector.load %arg3[%c0_3, %c0_4] : memref<1x128xf32, #tpu.memory_space<vmem>>, vector<1x128xf32>
    %4 = vector.broadcast %3 : vector<1x128xf32> to vector<32x128xf32>
    %5 = arith.addf %2, %4 : vector<32x128xf32>
    %cst_5 = arith.constant 5.000000e-01 : f32
    %6 = vector.broadcast %cst_5 : f32 to vector<32x128xf32>
    %7 = arith.mulf %6, %5 : vector<32x128xf32>
    %cst_6 = arith.constant 0.707106769 : f32
    %8 = vector.broadcast %cst_6 : f32 to vector<32x128xf32>
    %9 = arith.mulf %5, %8 : vector<32x128xf32>
    %10 = math.erf %9 : vector<32x128xf32>
    %cst_7 = arith.constant 1.000000e+00 : f32
    %11 = vector.broadcast %cst_7 : f32 to vector<32x128xf32>
    %12 = arith.addf %11, %10 : vector<32x128xf32>
    %13 = arith.mulf %7, %12 : vector<32x128xf32>
    %c0_8 = arith.constant 0 : index
    %c0_9 = arith.constant 0 : index
    %14 = vector.load %arg4[%c0_8, %c0_9] : memref<32x128xf32, #tpu.memory_space<vmem>>, vector<32x128xf32>
    %15 = arith.addf %13, %14 : vector<32x128xf32>
    %c0_10 = arith.constant 0 : index
    %c0_11 = arith.constant 0 : index
    %16 = vector.load %arg5[%c0_10, %c0_11] : memref<32x128xf32, #tpu.memory_space<vmem>>, vector<32x128xf32>
    tpu.vector_store %arg5[%c0_10, %c0_11], %15 {strides = array<i32>} : memref<32x128xf32, #tpu.memory_space<vmem>>, vector<32x128xf32>,
    return
  }
  func.func @transform_0(%arg0: i32) -> (i32, i32) {
    %c0_i32 = arith.constant 0 : i32
    %c0_i32_0 = arith.constant 0 : i32
    return %arg0, %c0_i32 : i32, i32
  }
  func.func @transform_1(%arg0: i32) -> (i32, i32) {
    %c0_i32 = arith.constant 0 : i32
    %c0_i32_0 = arith.constant 0 : i32
    %c0_i32_1 = arith.constant 0 : i32
    return %c0_i32, %c0_i32_0 : i32, i32
  }
  func.func @transform_2(%arg0: i32) -> (i32, i32) {
    %c0_i32 = arith.constant 0 : i32
    %c0_i32_0 = arith.constant 0 : i32
    %c0_i32_1 = arith.constant 0 : i32
    return %c0_i32, %c0_i32_0 : i32, i32
  }
  func.func @transform_3(%arg0: i32) -> (i32, i32) {
    %c0_i32 = arith.constant 0 : i32
    %c0_i32_0 = arith.constant 0 : i32
    return %arg0, %c0_i32 : i32, i32
  }
  func.func @transform_4(%arg0: i32) -> (i32, i32) {
    %c0_i32 = arith.constant 0 : i32
    %c0_i32_0 = arith.constant 0 : i32
    return %arg0, %c0_i32 : i32, i32
  }
}

</mosaic_0001>

<llo_original>
// kernel: tokenizer1d.1
$region0: #{tokenizer1d.1}
  #allocation0 [shape = 'u32[]', space=smem, size = 0x4, offset = 0x4, fixed_abs, tag = 'smem constant byte address 0x4 - core index']
  #allocation1 [shape = 'u32[72,128]{1,0:T(1,128)}', space=vmem, size = 0x9000, scoped, tag = 'internal scratch']
  %s0 = inlined_call_operand.vmem [shape: f32[32,128], index: 0, kind: input, shape index: {}]
  %s1 = inlined_call_operand.vmem [shape: f32[128,128], index: 1, kind: input, shape index: {}]
  %s2 = inlined_call_operand.vmem [shape: f32[1,128], index: 2, kind: input, shape index: {}]
  %s3 = inlined_call_operand.vmem [shape: f32[32,128], index: 3, kind: input, shape index: {}]
  %s4 = inlined_call_operand.hbm [shape: f32[32,128], index: 4, kind: output, shape index: {}]
  %s5 = sld [smem:[#allocation0]]
  $region26: #{tokenizer1d.1} parent=0
    _
  %s7 = ssub.s32 1, %s5
  %s8 = scalar_select 0, %s7, %s5
  $region1: #{tokenizer1d.1} parent=0
    #allocation2 [shape = 'u8[16384]{0}', space=vmem, size = 0x4000, scoped, tag = 'output window, operand 0, single buffered']
    #allocation3 [shape = 's32[1]{0}', space=sflag, size = 0x4, scoped, tag = 'scoped memory for tokenizer1d.1']
    %9 = vsyncpa [#allocation3], 0
    // Predicated region
    $region2: #{tokenizer1d.1} parent=1 // pred_check
      _
    $region3: #{tokenizer1d.1} parent=1 // pred_check_branch
      %11 = sbr.rel (0) target = $region5
    $region4: #{tokenizer1d.1} parent=1 // pred_region
      _
    $region5: #{tokenizer1d.1} parent=1 // pred_fallthru
      _
    // Predicated region
    $region6: #{tokenizer1d.1} parent=1 // pred_check
      _
    $region7: #{tokenizer1d.1} parent=1 // pred_check_branch
      %13 = sbr.rel (0) target = $region9
    $region8: #{tokenizer1d.1} parent=1 // pred_region
      _
    $region9: #{tokenizer1d.1} parent=1 // pred_fallthru
      _
    // Predicated region
    $region10: #{tokenizer1d.1} parent=1 // pred_check
      _
    $region11: #{tokenizer1d.1} parent=1 // pred_check_branch
      %15 = sbr.rel (0) target = $region13
    $region12: #{tokenizer1d.1} parent=1 // pred_region
      _
    $region13: #{tokenizer1d.1} parent=1 // pred_fallthru
      _
    // Predicated region
    $region14: #{tokenizer1d.1} parent=1 // pred_check
      _
    $region15: #{tokenizer1d.1} parent=1 // pred_check_branch
      %17 = sbr.rel (0) target = $region17
    $region16: #{tokenizer1d.1} parent=1 // pred_region
      _
    $region17: #{tokenizer1d.1} parent=1 // pred_fallthru
      _
    %v18 = vld [vmem:[%s0] sm:$0xff]
    %v19 = vld [vmem:[%s0 + $0x8] sm:$0xff]
    %v20 = vld [vmem:[%s0 + $0x10] sm:$0xff]
    %v21 = vld [vmem:[%s0 + $0x18] sm:$0xff]
    %v22 = vld [vmem:[%s1] sm:$0xff]
    %v23 = vld [vmem:[%s1 + $0x8] sm:$0xff]
    %v24 = vld [vmem:[%s1 + $0x10] sm:$0xff]
    %v25 = vld [vmem:[%s1 + $0x18] sm:$0xff]
    %v26 = vld [vmem:[%s1 + $0x20] sm:$0xff]
    %v27 = vld [vmem:[%s1 + $0x28] sm:$0xff]
    %v28 = vld [vmem:[%s1 + $0x30] sm:$0xff]
    %v29 = vld [vmem:[%s1 + $0x38] sm:$0xff]
    %v30 = vld [vmem:[%s1 + $0x40] sm:$0xff]
    %v31 = vld [vmem:[%s1 + $0x48] sm:$0xff]
    %v32 = vld [vmem:[%s1 + $0x50] sm:$0xff]
    %v33 = vld [vmem:[%s1 + $0x58] sm:$0xff]
    %v34 = vld [vmem:[%s1 + $0x60] sm:$0xff]
    %v35 = vld [vmem:[%s1 + $0x68] sm:$0xff]
    %v36 = vld [vmem:[%s1 + $0x70] sm:$0xff]
    %v37 = vld [vmem:[%s1 + $0x78] sm:$0xff]
    %v38 = vld [vmem:[%s2] sm:$0x1]
    %v40 = vperm.slane %v38, 0
    %42 = vmatpush.msra.mxu0 %v37
    %43 = vmatpush.msra.mxu0 %v36
    %44 = vmatpush.msra.mxu0 %v35
    %45 = vmatpush.msra.mxu0 %v34
    %46 = vmatpush.msra.mxu0 %v33
    %47 = vmatpush.msra.mxu0 %v32
    %48 = vmatpush.msra.mxu0 %v31
    %49 = vmatpush.msra.mxu0 %v30
    %50 = vmatpush.msra.mxu0 %v29
    %51 = vmatpush.msra.mxu0 %v28
    %52 = vmatpush.msra.mxu0 %v27
    %53 = vmatpush.msra.mxu0 %v26
    %54 = vmatpush.msra.mxu0 %v25
    %55 = vmatpush.msra.mxu0 %v24
    %56 = vmatpush.msra.mxu0 %v23
    %57 = vmatpush.msra.mxu0 %v22
    %58 = vmatmul.f32.gmra.mxu0 %v18
    %v59 = vpop.f32.mrf.mxu0
    %v60 = vadd.f32 %v40, %v59
    %61 = vmatmul.f32.gmra.mxu0 %v19
    %v62 = vpop.f32.mrf.mxu0
    %v63 = vadd.f32 %v40, %v62
    %64 = vmatmul.f32.gmra.mxu0 %v20
    %v65 = vpop.f32.mrf.mxu0
    %v66 = vadd.f32 %v40, %v65
    %67 = vmatmul.f32.gmra.mxu0 %v21
    %v68 = vpop.f32.mrf.mxu0
    %v69 = vadd.f32 %v40, %v68
    %70 = vdwg.mxu0
    %v71 = vmul.f32 %v60, 0.5
    %v72 = vmul.f32 %v63, 0.5
    %v73 = vmul.f32 %v66, 0.5
    %v74 = vmul.f32 %v69, 0.5
    %v75 = vmul.f32 %v60, 0.70710677
    %v76 = vmul.f32 %v63, 0.70710677
    %v77 = vmul.f32 %v66, 0.70710677
    %v78 = vmul.f32 %v69, 0.70710677
    %v79 = vmul.f32 %v75, %v75
    %v80 = vmin.f32 16.0, %v79
    %v81 = vmul.f32 %v80, 2.1237322e-06
    %v82 = vadd.f32 %v81, 0.00028619796
    %v83 = vmul.f32 %v80, %v82
    %v84 = vadd.f32 %v83, 0.0036580483
    %v85 = vmul.f32 %v80, %v84
    %v86 = vadd.f32 %v85, 0.05243302
    %v87 = vmul.f32 %v80, %v86
    %v88 = vadd.f32 %v87, 0.18741608
    %v89 = vmul.f32 %v80, %v88
    %v90 = vadd.f32 %v89, 1.1283791
    %v91 = vmul.f32 %v75, %v90
    %v92 = vmul.f32 %v80, 3.8918573e-05
    %v93 = vadd.f32 %v92, 0.001143296
    %v94 = vmul.f32 %v80, %v93
    %v95 = vadd.f32 %v94, 0.014752088
    %v96 = vmul.f32 %v80, %v95
    %v97 = vadd.f32 %v96, 0.112945676
    %v98 = vmul.f32 %v80, %v97
    %v99 = vadd.f32 %v98, 0.4994258
    %v100 = vmul.f32 %v80, %v99
    %v101 = vadd.f32 %v100, 1.0
    %v102 = vrcp.pop %v101
    %v103 = vmul.f32 %v101, %v102
    %v104 = vsub.f32 1.0, %v103
    %v105 = vmul.f32 %v102, %v104
    %v106 = vadd.f32 %v102, %v105
    %vm107 = vweird.f32 %v101
    %vm108 = vweird.f32 %v102
    %vm109 = vmor %vm107, %vm108
    %v110 = vsel %vm109, %v102, %v106
    %v111 = vand.u32 2147483647, %v101
    %vm112 = vcmp.eq.f32.partialorder %v111, 8.507059e+37
    %v113 = vand.u32 %v101, 2147483648
    %v114 = vor.u32 1.1754944e-38, %v113
    %v115 = vsel %vm112, %v114, %v110
    %v116 = vmul.f32 %v91, %v115
    %v117 = vmin.f32 %v116, 1.0
    %v118 = vmax.f32 %v117, -1.0
    %v119 = vmul.f32 %v76, %v76
    %v120 = vmin.f32 16.0, %v119
    %v121 = vmul.f32 %v120, 2.1237322e-06
    %v122 = vadd.f32 %v121, 0.00028619796
    %v123 = vmul.f32 %v120, %v122
    %v124 = vadd.f32 %v123, 0.0036580483
    %v125 = vmul.f32 %v120, %v124
    %v126 = vadd.f32 %v125, 0.05243302
    %v127 = vmul.f32 %v120, %v126
    %v128 = vadd.f32 %v127, 0.18741608
    %v129 = vmul.f32 %v120, %v128
    %v130 = vadd.f32 %v129, 1.1283791
    %v131 = vmul.f32 %v76, %v130
    %v132 = vmul.f32 %v120, 3.8918573e-05
    %v133 = vadd.f32 %v132, 0.001143296
    %v134 = vmul.f32 %v120, %v133
    %v135 = vadd.f32 %v134, 0.014752088
    %v136 = vmul.f32 %v120, %v135
    %v137 = vadd.f32 %v136, 0.112945676
    %v138 = vmul.f32 %v120, %v137
    %v139 = vadd.f32 %v138, 0.4994258
    %v140 = vmul.f32 %v120, %v139
    %v141 = vadd.f32 %v140, 1.0
    %v142 = vrcp.pop %v141
    %v143 = vmul.f32 %v141, %v142
    %v144 = vsub.f32 1.0, %v143
    %v145 = vmul.f32 %v142, %v144
    %v146 = vadd.f32 %v142, %v145
    %vm147 = vweird.f32 %v141
    %vm148 = vweird.f32 %v142
    %vm149 = vmor %vm147, %vm148
    %v150 = vsel %vm149, %v142, %v146
    %v151 = vand.u32 2147483647, %v141
    %vm152 = vcmp.eq.f32.partialorder %v151, 8.507059e+37
    %v153 = vand.u32 %v141, 2147483648
    %v154 = vor.u32 1.1754944e-38, %v153
    %v155 = vsel %vm152, %v154, %v150
    %v156 = vmul.f32 %v131, %v155
    %v157 = vmin.f32 %v156, 1.0
    %v158 = vmax.f32 %v157, -1.0
    %v159 = vmul.f32 %v77, %v77
    %v160 = vmin.f32 16.0, %v159
    %v161 = vmul.f32 %v160, 2.1237322e-06
    %v162 = vadd.f32 %v161, 0.00028619796
    %v163 = vmul.f32 %v160, %v162
    %v164 = vadd.f32 %v163, 0.0036580483
    %v165 = vmul.f32 %v160, %v164
    %v166 = vadd.f32 %v165, 0.05243302
    %v167 = vmul.f32 %v160, %v166
    %v168 = vadd.f32 %v167, 0.18741608
    %v169 = vmul.f32 %v160, %v168
    %v170 = vadd.f32 %v169, 1.1283791
    %v171 = vmul.f32 %v77, %v170
    %v172 = vmul.f32 %v160, 3.8918573e-05
    %v173 = vadd.f32 %v172, 0.001143296
    %v174 = vmul.f32 %v160, %v173
    %v175 = vadd.f32 %v174, 0.014752088
    %v176 = vmul.f32 %v160, %v175
    %v177 = vadd.f32 %v176, 0.112945676
    %v178 = vmul.f32 %v160, %v177
    %v179 = vadd.f32 %v178, 0.4994258
    %v180 = vmul.f32 %v160, %v179
    %v181 = vadd.f32 %v180, 1.0
    %v182 = vrcp.pop %v181
    %v183 = vmul.f32 %v181, %v182
    %v184 = vsub.f32 1.0, %v183
    %v185 = vmul.f32 %v182, %v184
    %v186 = vadd.f32 %v182, %v185
    %vm187 = vweird.f32 %v181
    %vm188 = vweird.f32 %v182
    %vm189 = vmor %vm187, %vm188
    %v190 = vsel %vm189, %v182, %v186
    %v191 = vand.u32 2147483647, %v181
    %vm192 = vcmp.eq.f32.partialorder %v191, 8.507059e+37
    %v193 = vand.u32 %v181, 2147483648
    %v194 = vor.u32 1.1754944e-38, %v193
    %v195 = vsel %vm192, %v194, %v190
    %v196 = vmul.f32 %v171, %v195
    %v197 = vmin.f32 %v196, 1.0
    %v198 = vmax.f32 %v197, -1.0
    %v199 = vmul.f32 %v78, %v78
    %v200 = vmin.f32 16.0, %v199
    %v201 = vmul.f32 %v200, 2.1237322e-06
    %v202 = vadd.f32 %v201, 0.00028619796
    %v203 = vmul.f32 %v200, %v202
    %v204 = vadd.f32 %v203, 0.0036580483
    %v205 = vmul.f32 %v200, %v204
    %v206 = vadd.f32 %v205, 0.05243302
    %v207 = vmul.f32 %v200, %v206
    %v208 = vadd.f32 %v207, 0.18741608
    %v209 = vmul.f32 %v200, %v208
    %v210 = vadd.f32 %v209, 1.1283791
    %v211 = vmul.f32 %v78, %v210
    %v212 = vmul.f32 %v200, 3.8918573e-05
    %v213 = vadd.f32 %v212, 0.001143296
    %v214 = vmul.f32 %v200, %v213
    %v215 = vadd.f32 %v214, 0.014752088
    %v216 = vmul.f32 %v200, %v215
    %v217 = vadd.f32 %v216, 0.112945676
    %v218 = vmul.f32 %v200, %v217
    %v219 = vadd.f32 %v218, 0.4994258
    %v220 = vmul.f32 %v200, %v219
    %v221 = vadd.f32 %v220, 1.0
    %v222 = vrcp.pop %v221
    %v223 = vmul.f32 %v221, %v222
    %v224 = vsub.f32 1.0, %v223
    %v225 = vmul.f32 %v222, %v224
    %v226 = vadd.f32 %v222, %v225
    %vm227 = vweird.f32 %v221
    %vm228 = vweird.f32 %v222
    %vm229 = vmor %vm227, %vm228
    %v230 = vsel %vm229, %v222, %v226
    %v231 = vand.u32 2147483647, %v221
    %vm232 = vcmp.eq.f32.partialorder %v231, 8.507059e+37
    %v233 = vand.u32 %v221, 2147483648
    %v234 = vor.u32 1.1754944e-38, %v233
    %v235 = vsel %vm232, %v234, %v230
    %v236 = vmul.f32 %v211, %v235
    %v237 = vmin.f32 %v236, 1.0
    %v238 = vmax.f32 %v237, -1.0
    %v239 = vadd.f32 %v118, 1.0
    %v240 = vadd.f32 %v158, 1.0
    %v241 = vadd.f32 %v198, 1.0
    %v242 = vadd.f32 %v238, 1.0
    %v243 = vmul.f32 %v71, %v239
    %v244 = vmul.f32 %v72, %v240
    %v245 = vmul.f32 %v73, %v241
    %v246 = vmul.f32 %v74, %v242
    %v247 = vld [vmem:[%s3] sm:$0xff]
    %v248 = vld [vmem:[%s3 + $0x8] sm:$0xff]
    %v249 = vld [vmem:[%s3 + $0x10] sm:$0xff]
    %v250 = vld [vmem:[%s3 + $0x18] sm:$0xff]
    %v251 = vadd.f32 %v243, %v247
    %v252 = vadd.f32 %v244, %v248
    %v253 = vadd.f32 %v245, %v249
    %v254 = vadd.f32 %v246, %v250
    %255 = vst [vmem:[#allocation2] sm:$0xff] %v251
    %256 = vst [vmem:[#allocation2 + $0x8] sm:$0xff] %v252
    %257 = vst [vmem:[#allocation2 + $0x10] sm:$0xff] %v253
    %258 = vst [vmem:[#allocation2 + $0x18] sm:$0xff] %v254
    // Predicated region
    $region18: #{tokenizer1d.1} parent=1 // pred_check
      _
    $region19: #{tokenizer1d.1} parent=1 // pred_check_branch
      %260 = sbr.rel (0) target = $region21
    $region20: #{tokenizer1d.1} parent=1 // pred_region
      %262 = vsyncadd [#allocation3], 0
      %s263 = sshll.u32 [#allocation2], 4
      %s264 = int_to_ptr.vmem [resolvable:$true] %s263
      %s265 = sshll.u32 %s4, 4
      %s266 = int_to_ptr.hbm [resolvable:$true] %s265
      %271 = dma.vmem_to_hbm [thread:$0]  %s264, 512, %s266, [#allocation3], 128, 128, 8
    $region21: #{tokenizer1d.1} parent=1 // pred_fallthru
      _
    // Predicated region
    $region22: #{tokenizer1d.1} parent=1 // pred_check
      _
    $region23: #{tokenizer1d.1} parent=1 // pred_check_branch
      %273 = sbr.rel (0) target = $region25
    $region24: #{tokenizer1d.1} parent=1 // pred_region
      %275 = dma.done [#allocation3], 512
    $region25: #{tokenizer1d.1} parent=1 // pred_fallthru
      _
    %276 = vsyncpa [#allocation3], 1

</llo_original>
